<compile_context>
chip_gen: v7x
topology: tpu7x:2x2x1
jax: 0.10.0
libtpu: 0.0.40
codegen_flags: <defaults>
</compile_context>

<pallas_src>
import functools

import jax
import jax.numpy as jnp
import numpy as np
from jax.experimental import pallas as pl
from jax.experimental.pallas import tpu as pltpu

_LANES = 128  # lane width of a vreg; channel axes are padded to this


# ----------------------------- Pallas kernel ------------------------------- #
def _fused_convblock_kernel(x_ref, w1_ref, b1_ref, w2_ref, b2_ref,
                            s2_ref, t2_ref, o_ref, y1_ref,
                            *, fw, dilation, width):
    """Fused conv1+ReLU(+BN1 folded) -> conv2+ReLU+BN2 for one batch element.

    x_ref  : (1, H*W, CP)      bf16 flattened NHWC slab (channels padded to CP)
    w1_ref : (fw*CP, CP)       bf16 conv1 weights, taps stacked along K
    b1_ref : (1, CP)           f32 conv1 bias
    w2_ref : (fw*CP, CP)       bf16 conv2 weights with BN1 scale folded in
    b2_ref : (1, CP)           f32 conv2 bias with BN1 shift folded in
    s2_ref : (1, CP)           f32 BN2 scale  (gamma / sqrt(var+eps))
    t2_ref : (1, CP)           f32 BN2 shift  (beta - mean*scale)
    o_ref  : (1, H2*W, CP)     f32 output
    y1_ref : (H1*W, CP)        bf16 VMEM scratch holding the layer-1 output
    """
    rows1 = y1_ref.shape[0]           # (H  - d*(fw-1)) * W
    rows2 = o_ref.shape[1]            # (H1 - d*(fw-1)) * W
    step = dilation * width           # flattened-row stride of one dilated tap

    # ---- layer 1: conv1 + bias + ReLU (BN1 affine folded into layer 2) ----
    # im2col: lane-concatenate the fw dilated taps (full-128 chunks -> cheap),
    # then a single MXU dot with K = fw*CP.
    taps = [x_ref[0, pl.ds(k * step, rows1), :] for k in range(fw)]
    x_cols = jnp.concatenate(taps, axis=-1)                         # (rows1, fw*CP)
    acc1 = jnp.dot(x_cols, w1_ref[...], preferred_element_type=jnp.float32)
    y1 = jnp.maximum(acc1 + b1_ref[...], 0.0)                       # bias + ReLU (f32)
    y1_ref[...] = y1.astype(y1_ref.dtype)                           # stays in VMEM

    # ---- layer 2: conv2' + bias' + ReLU + BN2 affine ----
    taps = [y1_ref[pl.ds(k * step, rows2), :] for k in range(fw)]
    y_cols = jnp.concatenate(taps, axis=-1)
    acc2 = jnp.dot(y_cols, w2_ref[...], preferred_element_type=jnp.float32)
    y2 = jnp.maximum(acc2 + b2_ref[...], 0.0)
    o_ref[0] = y2 * s2_ref[...] + t2_ref[...]                       # lane-dense store


# ------------------------------ helpers ------------------------------------ #
def _pad_lanes(a, lanes=_LANES):
    pad = lanes - a.shape[-1]
    if pad == 0:
        return a
    return jnp.pad(a, [(0, 0)] * (a.ndim - 1) + [(0, pad)])


def _pad_weight(w_fic, lanes=_LANES):
    fw, cin, cout = w_fic.shape
    return jnp.pad(w_fic, ((0, 0), (0, lanes - cin), (0, lanes - cout)))


# ------------------------------ ConvBlock ----------------------------------- #
class ConvBlockPallas:
    def __init__(self, filter_width, input_filters, nb_filters, dilation,
                 batch_norm, key):
        self.fw = filter_width
        self.cin = input_filters
        self.cout = nb_filters
        self.dilation = dilation
        self.batch_norm = batch_norm
        eps = 1e-5

        keys = jax.random.split(key, 12)

        def conv_params(kw, kb, cin):
            bound = 1.0 / np.sqrt(cin * filter_width * 1)
            w = jax.random.uniform(kw, (filter_width, cin, nb_filters),
                                   jnp.float32, -bound, bound)
            b = jax.random.uniform(kb, (nb_filters,), jnp.float32, -bound, bound)
            return w, b

        def bn_params(kg, kb, km, kv):
            if not batch_norm:
                return (jnp.ones((nb_filters,), jnp.float32),
                        jnp.zeros((nb_filters,), jnp.float32))
            gamma = jax.random.uniform(kg, (nb_filters,), jnp.float32, 0.5, 1.5)
            beta = jax.random.uniform(kb, (nb_filters,), jnp.float32, -0.5, 0.5)
            rmean = jax.random.uniform(km, (nb_filters,), jnp.float32, -0.5, 0.5)
            rvar = jax.random.uniform(kv, (nb_filters,), jnp.float32, 0.5, 1.5)
            scale = gamma / jnp.sqrt(rvar + eps)
            shift = beta - rmean * scale
            return scale, shift

        # Raw (spec) parameters.
        self.w1, self.b1 = conv_params(keys[0], keys[1], input_filters)
        self.w2, self.b2 = conv_params(keys[2], keys[3], nb_filters)
        self.s1, self.t1 = bn_params(keys[4], keys[5], keys[6], keys[7])
        self.s2, self.t2 = bn_params(keys[8], keys[9], keys[10], keys[11])

        # Fold BN1's per-channel affine into conv2 (exact algebra):
        #   conv2(s1*y + t1) = conv2_with(w2*s1)(y) + [b2 + sum_{k,i} w2[k,i,:]*t1[i]]
        self.w2f = self.w2 * self.s1[None, :, None]
        self.b2f = self.b2 + jnp.einsum("kio,i->o", self.w2, self.t1)

        # Lane-padded / bf16 kernel parameters (computed once at init).
        cp = _LANES
        self.w1p = _pad_weight(self.w1).reshape(self.fw * cp, cp).astype(jnp.bfloat16)
        self.b1p = _pad_lanes(self.b1.reshape(1, -1)).astype(jnp.float32)
        self.w2p = _pad_weight(self.w2f).reshape(self.fw * cp, cp).astype(jnp.bfloat16)
        self.b2p = _pad_lanes(self.b2f.reshape(1, -1)).astype(jnp.float32)
        self.s2p = _pad_lanes(self.s2.reshape(1, -1)).astype(jnp.float32)
        self.t2p = _pad_lanes(self.t2.reshape(1, -1)).astype(jnp.float32)

    def __call__(self, x_nchw):
        n, cin, h, w = x_nchw.shape
        assert cin == self.cin
        fw, d, cp = self.fw, self.dilation, _LANES
        h1 = h - d * (fw - 1)
        h2 = h1 - d * (fw - 1)
        assert h1 > 0 and h2 > 0, "time axis too short for the dilated convs"

        # NCHW -> NHWC -> flattened rows. The full W extent is kept per block,
        # so each dilated tap is a contiguous slice of the flattened row axis
        # (the conv kernel's W-extent is 1). Channels zero-padded to 128 lanes.
        x = jnp.transpose(x_nchw.astype(jnp.float32), (0, 2, 3, 1))
        x_flat = _pad_lanes(x.reshape(n, h * w, cin)).astype(jnp.bfloat16)

        kernel = functools.partial(_fused_convblock_kernel,
                                   fw=fw, dilation=d, width=w)

        out_flat = pl.pallas_call(
            kernel,
            out_shape=jax.ShapeDtypeStruct((n, h2 * w, cp), jnp.float32),
            grid_spec=pltpu.PrefetchScalarGridSpec(
                num_scalar_prefetch=0,
                grid=(n,),
                in_specs=[
                    pl.BlockSpec((1, h * w, cp), lambda i: (i, 0, 0)),
                    pl.BlockSpec((fw * cp, cp), lambda i: (0, 0)),
                    pl.BlockSpec((1, cp), lambda i: (0, 0)),
                    pl.BlockSpec((fw * cp, cp), lambda i: (0, 0)),
                    pl.BlockSpec((1, cp), lambda i: (0, 0)),
                    pl.BlockSpec((1, cp), lambda i: (0, 0)),
                    pl.BlockSpec((1, cp), lambda i: (0, 0)),
                ],
                out_specs=pl.BlockSpec((1, h2 * w, cp), lambda i: (i, 0, 0)),
                scratch_shapes=[pltpu.VMEM((h1 * w, cp), jnp.bfloat16)],
            ),
            compiler_params=pltpu.CompilerParams(
                dimension_semantics=("parallel",)),
        )(x_flat, self.w1p, self.b1p, self.w2p, self.b2p, self.s2p, self.t2p)

        out = out_flat[:, :, :self.cout].reshape(n, h2, w, self.cout)
        return jnp.transpose(out, (0, 3, 1, 2))          # back to NCHW


# --------------------------- Pure-JAX references ---------------------------- #
def _ref_conv(x_nchw, w_fic, b, dilation, operand_dtype=jnp.float32):
    w_oihw = jnp.transpose(w_fic, (2, 1, 0))[..., None].astype(operand_dtype)
    y = jax.lax.conv_general_dilated(
        x_nchw.astype(operand_dtype), w_oihw, window_strides=(1, 1),
        padding="VALID", rhs_dilation=(dilation, 1),
        dimension_numbers=("NCHW", "OIHW", "NCHW"),
        preferred_element_type=jnp.float32)
    return y + b[None, :, None, None]


def _ref_spec_f32(x, blk):
    """Pure-f32 reference in the exact PyTorch ConvBlock order."""
    d = blk.dilation
    y = jnp.maximum(_ref_conv(x, blk.w1, blk.b1, d), 0.0)
    y = y * blk.s1[None, :, None, None] + blk.t1[None, :, None, None]
    y = jnp.maximum(_ref_conv(y, blk.w2, blk.b2, d), 0.0)
    return y * blk.s2[None, :, None, None] + blk.t2[None, :, None, None]


def _ref_matched_precision(x, blk):
    """Reference matching the kernel's precision/fold choices (bf16 conv
    operands, f32 accumulation, BN1 folded into conv2) via XLA convolutions."""
    d = blk.dilation
    y = jnp.maximum(_ref_conv(x, blk.w1, blk.b1, d, jnp.bfloat16), 0.0)
    y = jnp.maximum(_ref_conv(y, blk.w2f, blk.b2f, d, jnp.bfloat16), 0.0)
    return y * blk.s2[None, :, None, None] + blk.t2[None, :, None, None]


# --------------------------------- main ------------------------------------- #
if __name__ == "__main__":
    key = jax.random.PRNGKey(0)
    k_x, k_params = jax.random.split(key)

    # Small shapes: batch=2, input_filters=4, time=16, sensors=8
    N, C_IN, H, W = 2, 4, 16, 8
    FILTER_WIDTH, NB_FILTERS, DILATION, BATCH_NORM = 3, 8, 2, True

    x = jax.random.normal(k_x, (N, C_IN, H, W), jnp.float32)
    block = ConvBlockPallas(FILTER_WIDTH, C_IN, NB_FILTERS, DILATION,
                            BATCH_NORM, k_params)

    out = jax.block_until_ready(block(x))
    expected_h = H - 2 * DILATION * (FILTER_WIDTH - 1)
    assert out.shape == (N, NB_FILTERS, expected_h, W), out.shape

    # Tight check vs. a reference with identical precision/fold choices:
    # validates the Pallas im2col / padding / tap-slicing / epilogue mechanics.
    ref_mp = jax.block_until_ready(_ref_matched_precision(x, block))
    np.testing.assert_allclose(np.asarray(out), np.asarray(ref_mp),
                               rtol=2e-3, atol=2e-3)

    # Loose check vs. the pure-f32 PyTorch-order reference. Tolerances are
    # loosened (as flagged in the review) because the kernel feeds bf16
    # operands to the MXU; accumulation stays f32 so error is bounded.
    ref_f32 = jax.block_until_ready(_ref_spec_f32(x, block))
    np.testing.assert_allclose(np.asarray(out), np.asarray(ref_f32),
                               rtol=7e-2, atol=7e-2)

    print("KERNEL_OK")
</pallas_src>

<mosaic_0001>
module attributes {stable_mosaic.version = 11 : i64} {
  func.func @_fused_convblock_kernel(%arg0: i32, %arg1: memref<1x128x128xbf16, #tpu.memory_space<vmem>>, %arg2: memref<384x128xbf16, #tpu.memory_space<vmem>>, %arg3: memref<1x128xf32, #tpu.memory_space<vmem>>, %arg4: memref<384x128xbf16, #tpu.memory_space<vmem>>, %arg5: memref<1x128xf32, #tpu.memory_space<vmem>>, %arg6: memref<1x128xf32, #tpu.memory_space<vmem>>, %arg7: memref<1x128xf32, #tpu.memory_space<vmem>>, %arg8: memref<1x64x128xf32, #tpu.memory_space<vmem>>, %arg9: memref<96x128xbf16, #tpu.memory_space<vmem>>) attributes {dimension_semantics = [#tpu.dimension_semantics<parallel>], iteration_bounds = array<i64: 2>, scalar_prefetch = 0 : i64, scratch_operands = 1 : i64, tpu.core_type = #tpu.core_type<tc>, window_params = [{transform_indices = @transform_0, window_bounds = array<i64: 1, 128, 128>}, {pipeline_mode = #tpu.pipeline_mode<synchronous>, transform_indices = @transform_1, window_bounds = array<i64: 384, 128>}, {pipeline_mode = #tpu.pipeline_mode<synchronous>, transform_indices = @transform_2, window_bounds = array<i64: 1, 128>}, {pipeline_mode = #tpu.pipeline_mode<synchronous>, transform_indices = @transform_3, window_bounds = array<i64: 384, 128>}, {pipeline_mode = #tpu.pipeline_mode<synchronous>, transform_indices = @transform_4, window_bounds = array<i64: 1, 128>}, {pipeline_mode = #tpu.pipeline_mode<synchronous>, transform_indices = @transform_5, window_bounds = array<i64: 1, 128>}, {pipeline_mode = #tpu.pipeline_mode<synchronous>, transform_indices = @transform_6, window_bounds = array<i64: 1, 128>}, {transform_indices = @transform_7, window_bounds = array<i64: 1, 64, 128>}]} {
    %c0 = arith.constant 0 : index
    %c0_0 = arith.constant 0 : index
    %c0_1 = arith.constant 0 : index
    %0 = vector.load %arg1[%c0, %c0_0, %c0_1] : memref<1x128x128xbf16, #tpu.memory_space<vmem>>, vector<1x96x128xbf16>
    %1 = vector.shape_cast %0 : vector<1x96x128xbf16> to vector<96x128xbf16>
    %c0_2 = arith.constant 0 : index
    %c16 = arith.constant 16 : index
    %c0_3 = arith.constant 0 : index
    %2 = vector.load %arg1[%c0_2, %c16, %c0_3] : memref<1x128x128xbf16, #tpu.memory_space<vmem>>, vector<1x96x128xbf16>
    %3 = vector.shape_cast %2 : vector<1x96x128xbf16> to vector<96x128xbf16>
    %c0_4 = arith.constant 0 : index
    %c32 = arith.constant 32 : index
    %c0_5 = arith.constant 0 : index
    %4 = vector.load %arg1[%c0_4, %c32, %c0_5] : memref<1x128x128xbf16, #tpu.memory_space<vmem>>, vector<1x96x128xbf16>
    %5 = vector.shape_cast %4 : vector<1x96x128xbf16> to vector<96x128xbf16>
    %6 = tpu.concatenate %1, %3, %5 in 1 : vector<96x128xbf16>, vector<96x128xbf16>, vector<96x128xbf16> -> vector<96x384xbf16>
    %c0_6 = arith.constant 0 : index
    %c0_7 = arith.constant 0 : index
    %7 = vector.load %arg2[%c0_6, %c0_7] : memref<384x128xbf16, #tpu.memory_space<vmem>>, vector<384x128xbf16>
    %cst = arith.constant dense<0.000000e+00> : vector<96x128xf32>
    %8 = tpu.matmul %6, %7, %cst {dimension_numbers = #tpu.dot_dimension_numbers<[1], [0], [0], [1], [0, 0, 1, 1], [], []>} : vector<96x384xbf16>, vector<384x128xbf16>, vector<96x128xf32> -> vector<96x128xf32>
    %c0_8 = arith.constant 0 : index
    %c0_9 = arith.constant 0 : index
    %9 = vector.load %arg3[%c0_8, %c0_9] : memref<1x128xf32, #tpu.memory_space<vmem>>, vector<1x128xf32>
    %10 = vector.broadcast %9 : vector<1x128xf32> to vector<96x128xf32>
    %11 = arith.addf %8, %10 : vector<96x128xf32>
    %cst_10 = arith.constant 0.000000e+00 : f32
    %12 = vector.broadcast %cst_10 : f32 to vector<96x128xf32>
    %13 = arith.maximumf %11, %12 : vector<96x128xf32>
    %14 = arith.truncf %13 : vector<96x128xf32> to vector<96x128xbf16>
    %c0_11 = arith.constant 0 : index
    %c0_12 = arith.constant 0 : index
    %15 = vector.load %arg9[%c0_11, %c0_12] : memref<96x128xbf16, #tpu.memory_space<vmem>>, vector<96x128xbf16>
    tpu.vector_store %arg9[%c0_11, %c0_12], %14 {strides = array<i32>} : memref<96x128xbf16, #tpu.memory_space<vmem>>, vector<96x128xbf16>,
    %c0_13 = arith.constant 0 : index
    %c0_14 = arith.constant 0 : index
    %16 = vector.load %arg9[%c0_13, %c0_14] : memref<96x128xbf16, #tpu.memory_space<vmem>>, vector<64x128xbf16>
    %c16_15 = arith.constant 16 : index
    %c0_16 = arith.constant 0 : index
    %17 = vector.load %arg9[%c16_15, %c0_16] : memref<96x128xbf16, #tpu.memory_space<vmem>>, vector<64x128xbf16>
    %c32_17 = arith.constant 32 : index
    %c0_18 = arith.constant 0 : index
    %18 = vector.load %arg9[%c32_17, %c0_18] : memref<96x128xbf16, #tpu.memory_space<vmem>>, vector<64x128xbf16>
    %19 = tpu.concatenate %16, %17, %18 in 1 : vector<64x128xbf16>, vector<64x128xbf16>, vector<64x128xbf16> -> vector<64x384xbf16>
    %c0_19 = arith.constant 0 : index
    %c0_20 = arith.constant 0 : index
    %20 = vector.load %arg4[%c0_19, %c0_20] : memref<384x128xbf16, #tpu.memory_space<vmem>>, vector<384x128xbf16>
    %cst_21 = arith.constant dense<0.000000e+00> : vector<64x128xf32>
    %21 = tpu.matmul %19, %20, %cst_21 {dimension_numbers = #tpu.dot_dimension_numbers<[1], [0], [0], [1], [0, 0, 1, 1], [], []>} : vector<64x384xbf16>, vector<384x128xbf16>, vector<64x128xf32> -> vector<64x128xf32>
    %c0_22 = arith.constant 0 : index
    %c0_23 = arith.constant 0 : index
    %22 = vector.load %arg5[%c0_22, %c0_23] : memref<1x128xf32, #tpu.memory_space<vmem>>, vector<1x128xf32>
    %23 = vector.broadcast %22 : vector<1x128xf32> to vector<64x128xf32>
    %24 = arith.addf %21, %23 : vector<64x128xf32>
    %cst_24 = arith.constant 0.000000e+00 : f32
    %25 = vector.broadcast %cst_24 : f32 to vector<64x128xf32>
    %26 = arith.maximumf %24, %25 : vector<64x128xf32>
    %c0_25 = arith.constant 0 : index
    %c0_26 = arith.constant 0 : index
    %27 = vector.load %arg6[%c0_25, %c0_26] : memref<1x128xf32, #tpu.memory_space<vmem>>, vector<1x128xf32>
    %28 = vector.broadcast %27 : vector<1x128xf32> to vector<64x128xf32>
    %29 = arith.mulf %26, %28 : vector<64x128xf32>
    %c0_27 = arith.constant 0 : index
    %c0_28 = arith.constant 0 : index
    %30 = vector.load %arg7[%c0_27, %c0_28] : memref<1x128xf32, #tpu.memory_space<vmem>>, vector<1x128xf32>
    %31 = vector.broadcast %30 : vector<1x128xf32> to vector<64x128xf32>
    %32 = arith.addf %29, %31 : vector<64x128xf32>
    %c0_29 = arith.constant 0 : index
    %c0_30 = arith.constant 0 : index
    %c0_31 = arith.constant 0 : index
    %33 = vector.load %arg8[%c0_29, %c0_30, %c0_31] : memref<1x64x128xf32, #tpu.memory_space<vmem>>, vector<1x64x128xf32>
    %34 = vector.shape_cast %33 : vector<1x64x128xf32> to vector<64x128xf32>
    %35 = vector.shape_cast %32 : vector<64x128xf32> to vector<1x64x128xf32>
    tpu.vector_store %arg8[%c0_29, %c0_30, %c0_31], %35 {strides = array<i32>} : memref<1x64x128xf32, #tpu.memory_space<vmem>>, vector<1x64x128xf32>,
    return
  }
  func.func @transform_0(%arg0: i32) -> (i32, i32, i32) {
    %c0_i32 = arith.constant 0 : i32
    %c0_i32_0 = arith.constant 0 : i32
    %c0_i32_1 = arith.constant 0 : i32
    return %arg0, %c0_i32, %c0_i32_0 : i32, i32, i32
  }
  func.func @transform_1(%arg0: i32) -> (i32, i32) {
    %c0_i32 = arith.constant 0 : i32
    %c0_i32_0 = arith.constant 0 : i32
    %c0_i32_1 = arith.constant 0 : i32
    return %c0_i32, %c0_i32_0 : i32, i32
  }
  func.func @transform_2(%arg0: i32) -> (i32, i32) {
    %c0_i32 = arith.constant 0 : i32
    %c0_i32_0 = arith.constant 0 : i32
    %c0_i32_1 = arith.constant 0 : i32
    return %c0_i32, %c0_i32_0 : i32, i32
  }
  func.func @transform_3(%arg0: i32) -> (i32, i32) {
    %c0_i32 = arith.constant 0 : i32
    %c0_i32_0 = arith.constant 0 : i32
    %c0_i32_1 = arith.constant 0 : i32
    return %c0_i32, %c0_i32_0 : i32, i32
  }
  func.func @transform_4(%arg0: i32) -> (i32, i32) {
    %c0_i32 = arith.constant 0 : i32
    %c0_i32_0 = arith.constant 0 : i32
    %c0_i32_1 = arith.constant 0 : i32
    return %c0_i32, %c0_i32_0 : i32, i32
  }
  func.func @transform_5(%arg0: i32) -> (i32, i32) {
    %c0_i32 = arith.constant 0 : i32
    %c0_i32_0 = arith.constant 0 : i32
    %c0_i32_1 = arith.constant 0 : i32
    return %c0_i32, %c0_i32_0 : i32, i32
  }
  func.func @transform_6(%arg0: i32) -> (i32, i32) {
    %c0_i32 = arith.constant 0 : i32
    %c0_i32_0 = arith.constant 0 : i32
    %c0_i32_1 = arith.constant 0 : i32
    return %c0_i32, %c0_i32_0 : i32, i32
  }
  func.func @transform_7(%arg0: i32) -> (i32, i32, i32) {
    %c0_i32 = arith.constant 0 : i32
    %c0_i32_0 = arith.constant 0 : i32
    %c0_i32_1 = arith.constant 0 : i32
    return %arg0, %c0_i32, %c0_i32_0 : i32, i32, i32
  }
}

</mosaic_0001>

<llo_original>
// kernel: tpu_custom_call.1
$region0: #{tpu_custom_call.1}
  #allocation0 [shape = 'u32[]', space=smem, size = 0x4, offset = 0x4, fixed_abs, tag = 'smem constant byte address 0x4 - core index']
  #allocation1 [shape = 'u32[144,128]{1,0:T(1,128)}', space=vmem, size = 0x12000, scoped, tag = 'internal scratch']
  #allocation2 [shape = 'bf16[96,128]{1,0:T(16,128)(2,1)}', space=vmem, size = 0x6000, scoped, tag = 'scratch operand']
  %s0 = inlined_call_operand.hbm [shape: bf16[2,128,128], index: 0, kind: input, shape index: {}]
  %s1 = inlined_call_operand.hbm [shape: bf16[384,128], index: 1, kind: input, shape index: {}]
  %s2 = inlined_call_operand.vmem [shape: f32[1,128], index: 2, kind: input, shape index: {}]
  %s3 = inlined_call_operand.hbm [shape: bf16[384,128], index: 3, kind: input, shape index: {}]
  %s4 = inlined_call_operand.vmem [shape: f32[1,128], index: 4, kind: input, shape index: {}]
  %s5 = inlined_call_operand.vmem [shape: f32[1,128], index: 5, kind: input, shape index: {}]
  %s6 = inlined_call_operand.vmem [shape: f32[1,128], index: 6, kind: input, shape index: {}]
  %s7 = inlined_call_operand.hbm [shape: f32[2,64,128], index: 7, kind: output, shape index: {}]
  %s8 = sld [smem:[#allocation0]]
  $region73: #{tpu_custom_call.1} parent=0
    _
  %s10 = ssub.s32 1, %s8
  %s11 = scalar_select 0, %s10, %s8
  $region1: #{tpu_custom_call.1} parent=0
    #allocation3 [shape = 'u8[65536]{0}', space=vmem, size = 0x10000, scoped, tag = 'input window, operand 0']
    #allocation4 [shape = 's32[2]{0}', space=sflag, size = 0x8, scoped, tag = 'scoped memory for tpu_custom_call.1']
    #allocation5 [shape = 's32[2]{0}', space=sflag, size = 0x8, scoped, tag = 'scoped memory for tpu_custom_call.1']
    #allocation6 [shape = 'u8[98304]{0}', space=vmem, size = 0x18000, scoped, tag = 'input window, operand 1, single buffered']
    #allocation7 [shape = 's32[1]{0}', space=sflag, size = 0x4, scoped, tag = 'scoped memory for tpu_custom_call.1']
    #allocation8 [shape = 'u8[98304]{0}', space=vmem, size = 0x18000, scoped, tag = 'input window, operand 3, single buffered']
    #allocation9 [shape = 'u8[65536]{0}', space=vmem, size = 0x10000, scoped, tag = 'output window, operand 0']
    %12 = vsyncpa [#allocation4], 0
    %s13 = scalar_lea.sflag [#allocation4], 1
    %14 = vsyncpa %s13, 0
    %15 = vsyncpa [#allocation7], 0
    %16 = vsyncpa [#allocation5], 0
    %s17 = scalar_lea.sflag [#allocation5], 1
    %18 = vsyncpa %s17, 0
    loop: start=0, step=1, limit=4
    $region2: #{tpu_custom_call.1} parent=1 // loop_pre_header
      _
    $region3: #{tpu_custom_call.1} parent=1 // loop_header
      %s20 = sphi 0, %s24
      %p21 = scmp.ge.s32.totalorder %s20, 4
      %s30 = sphi 0, %s32
      %s33 = sphi 0, %s30
      %s34 = sphi 0, %s33
      %s50 = sphi 0, %s34
      %s54 = sphi 0, %s54
      %s56 = sphi 0, %s54
      %s57 = sphi 0, %s56
      %s71 = sphi 0, %s57
      %s75 = sphi 0, %s75
      %s77 = sphi 0, %s75
      %s78 = sphi 0, %s77
      %s92 = sphi 0, %s78
      %s96 = sphi 0, %s96
      %s98 = sphi 0, %s96
      %s99 = sphi 0, %s98
      %s113 = sphi 0, %s99
      %s117 = sphi 0, %s117
      %s119 = sphi 0, %s117
      %s120 = sphi 0, %s119
      %s134 = sphi 0, %s120
      %s138 = sphi 0, %s138
      %s140 = sphi 0, %s138
      %s141 = sphi 0, %s140
      %s155 = sphi 0, %s141
      %s159 = sphi 0, %s159
      %s161 = sphi 0, %s159
      %s162 = sphi 0, %s161
      %s176 = sphi 0, %s162
      %s182 = sphi 0, %s184
      %s185 = sphi 0, %s182
      %s186 = sphi 0, %s185
      %s202 = sphi 0, %s186
    $region4: #{tpu_custom_call.1} parent=1 // loop_header_branch
      %23 = sbr.rel (%p21) target = $region8
    $region5: #{tpu_custom_call.1} parent=1 // loop_body
      %s25 = ssub.s32 %s20, 1
      %s26 = ssub.s32 %s20, 2
      %s27 = sadd.s32 %s20, 1
      %s28 = ssub.s32 %s20, %s27
      %p29 = scmp.eq.s32.totalorder %s28, 0
      %s31 = sadd.s32 %s30, 1
      %s32 = scalar_select %p29, %s30, %s31
      %p35 = pneg %p29
      %p36 = scmp.eq.s32.totalorder %s20, 1
      %p37 = por %p35, %p36
      %p38 = scmp.ne.s32.totalorder %s30, %s33
      %p39 = scmp.eq.s32.totalorder %s20, 0
      %p40 = por %p38, %p39
      %p41 = scmp.ne.s32.totalorder %s30, %s33
      %p42 = scmp.eq.s32.totalorder %s25, 1
      %p43 = por %p41, %p42
      %p44 = scmp.ne.s32.totalorder %s33, %s34
      %p45 = scmp.eq.s32.totalorder %s25, 0
      %p46 = por %p44, %p45
      %p47 = scmp.ne.s32.totalorder %s33, %s34
      %p48 = scmp.eq.s32.totalorder %s26, 1
      %p49 = por %p47, %p48
      %p51 = scmp.ne.s32.totalorder %s34, %s50
      %p52 = scmp.eq.s32.totalorder %s26, 0
      %p53 = por %p51, %p52
      %s55 = sadd.s32 %s54, 1
      %p58 = scmp.eq.s32.totalorder %s20, 1
      %p59 = scmp.ne.s32.totalorder %s54, %s56
      %p60 = scmp.eq.s32.totalorder %s20, 0
      %p61 = por %p59, %p60
      %p62 = scmp.ne.s32.totalorder %s54, %s56
      %p63 = scmp.eq.s32.totalorder %s25, 1
      %p64 = por %p62, %p63
      %p65 = scmp.ne.s32.totalorder %s56, %s57
      %p66 = scmp.eq.s32.totalorder %s25, 0
      %p67 = por %p65, %p66
      %p68 = scmp.ne.s32.totalorder %s56, %s57
      %p69 = scmp.eq.s32.totalorder %s26, 1
      %p70 = por %p68, %p69
      %p72 = scmp.ne.s32.totalorder %s57, %s71
      %p73 = scmp.eq.s32.totalorder %s26, 0
      %p74 = por %p72, %p73
      %s76 = sadd.s32 %s75, 1
      %p79 = scmp.eq.s32.totalorder %s20, 1
      %p80 = scmp.ne.s32.totalorder %s75, %s77
      %p81 = scmp.eq.s32.totalorder %s20, 0
      %p82 = por %p80, %p81
      %p83 = scmp.ne.s32.totalorder %s75, %s77
      %p84 = scmp.eq.s32.totalorder %s25, 1
      %p85 = por %p83, %p84
      %p86 = scmp.ne.s32.totalorder %s77, %s78
      %p87 = scmp.eq.s32.totalorder %s25, 0
      %p88 = por %p86, %p87
      %p89 = scmp.ne.s32.totalorder %s77, %s78
      %p90 = scmp.eq.s32.totalorder %s26, 1
      %p91 = por %p89, %p90
      %p93 = scmp.ne.s32.totalorder %s78, %s92
      %p94 = scmp.eq.s32.totalorder %s26, 0
      %p95 = por %p93, %p94
      %s97 = sadd.s32 %s96, 1
      %p100 = scmp.eq.s32.totalorder %s20, 1
      %p101 = scmp.ne.s32.totalorder %s96, %s98
      %p102 = scmp.eq.s32.totalorder %s20, 0
      %p103 = por %p101, %p102
      %p104 = scmp.ne.s32.totalorder %s96, %s98
      %p105 = scmp.eq.s32.totalorder %s25, 1
      %p106 = por %p104, %p105
      %p107 = scmp.ne.s32.totalorder %s98, %s99
      %p108 = scmp.eq.s32.totalorder %s25, 0
      %p109 = por %p107, %p108
      %p110 = scmp.ne.s32.totalorder %s98, %s99
      %p111 = scmp.eq.s32.totalorder %s26, 1
      %p112 = por %p110, %p111
      %p114 = scmp.ne.s32.totalorder %s99, %s113
      %p115 = scmp.eq.s32.totalorder %s26, 0
      %p116 = por %p114, %p115
      %s118 = sadd.s32 %s117, 1
      %p121 = scmp.eq.s32.totalorder %s20, 1
      %p122 = scmp.ne.s32.totalorder %s117, %s119
      %p123 = scmp.eq.s32.totalorder %s20, 0
      %p124 = por %p122, %p123
      %p125 = scmp.ne.s32.totalorder %s117, %s119
      %p126 = scmp.eq.s32.totalorder %s25, 1
      %p127 = por %p125, %p126
      %p128 = scmp.ne.s32.totalorder %s119, %s120
      %p129 = scmp.eq.s32.totalorder %s25, 0
      %p130 = por %p128, %p129
      %p131 = scmp.ne.s32.totalorder %s119, %s120
      %p132 = scmp.eq.s32.totalorder %s26, 1
      %p133 = por %p131, %p132
      %p135 = scmp.ne.s32.totalorder %s120, %s134
      %p136 = scmp.eq.s32.totalorder %s26, 0
      %p137 = por %p135, %p136
      %s139 = sadd.s32 %s138, 1
      %p142 = scmp.eq.s32.totalorder %s20, 1
      %p143 = scmp.ne.s32.totalorder %s138, %s140
      %p144 = scmp.eq.s32.totalorder %s20, 0
      %p145 = por %p143, %p144
      %p146 = scmp.ne.s32.totalorder %s138, %s140
      %p147 = scmp.eq.s32.totalorder %s25, 1
      %p148 = por %p146, %p147
      %p149 = scmp.ne.s32.totalorder %s140, %s141
      %p150 = scmp.eq.s32.totalorder %s25, 0
      %p151 = por %p149, %p150
      %p152 = scmp.ne.s32.totalorder %s140, %s141
      %p153 = scmp.eq.s32.totalorder %s26, 1
      %p154 = por %p152, %p153
      %p156 = scmp.ne.s32.totalorder %s141, %s155
      %p157 = scmp.eq.s32.totalorder %s26, 0
      %p158 = por %p156, %p157
      %s160 = sadd.s32 %s159, 1
      %p163 = scmp.eq.s32.totalorder %s20, 1
      %p164 = scmp.ne.s32.totalorder %s159, %s161
      %p165 = scmp.eq.s32.totalorder %s20, 0
      %p166 = por %p164, %p165
      %p167 = scmp.ne.s32.totalorder %s159, %s161
      %p168 = scmp.eq.s32.totalorder %s25, 1
      %p169 = por %p167, %p168
      %p170 = scmp.ne.s32.totalorder %s161, %s162
      %p171 = scmp.eq.s32.totalorder %s25, 0
      %p172 = por %p170, %p171
      %p173 = scmp.ne.s32.totalorder %s161, %s162
      %p174 = scmp.eq.s32.totalorder %s26, 1
      %p175 = por %p173, %p174
      %p177 = scmp.ne.s32.totalorder %s162, %s176
      %p178 = scmp.eq.s32.totalorder %s26, 0
      %p179 = por %p177, %p178
      %s180 = ssub.s32 %s20, %s27
      %p181 = scmp.eq.s32.totalorder %s180, 0
      %s183 = sadd.s32 %s182, 1
      %s184 = scalar_select %p181, %s182, %s183
      %p187 = pneg %p181
      %p188 = scmp.eq.s32.totalorder %s20, 1
      %p189 = por %p187, %p188
      %p190 = scmp.ne.s32.totalorder %s182, %s185
      %p191 = scmp.eq.s32.totalorder %s20, 0
      %p192 = por %p190, %p191
      %p193 = scmp.ne.s32.totalorder %s182, %s185
      %p194 = scmp.eq.s32.totalorder %s25, 1
      %p195 = por %p193, %p194
      %p196 = scmp.ne.s32.totalorder %s185, %s186
      %p197 = scmp.eq.s32.totalorder %s25, 0
      %p198 = por %p196, %p197
      %p199 = scmp.ne.s32.totalorder %s185, %s186
      %p200 = scmp.eq.s32.totalorder %s26, 1
      %p201 = por %p199, %p200
      %p203 = scmp.ne.s32.totalorder %s186, %s202
      %p204 = scmp.eq.s32.totalorder %s26, 0
      %p205 = por %p203, %p204
      %p206 = scmp.le.s32.totalorder 1, %s20
      %p207 = scmp.lt.s32.totalorder %s20, 3
      %p208 = pnand %p206, %p207
      %p209 = pneg %p208
      // Predicated region
      $region9: #{tpu_custom_call.1} parent=5 // pred_check
        _
      $region10: #{tpu_custom_call.1} parent=5 // pred_check_branch
        %211 = sbr.rel (%p208) target = $region12
      $region11: #{tpu_custom_call.1} parent=5 // pred_region
        %s212 = ssub.s32 %s20, 1
        // Predicated region
        $region13: #{tpu_custom_call.1} parent=11 // pred_check
          %p213 = pneg %p67
        $region14: #{tpu_custom_call.1} parent=11 // pred_check_branch
          %215 = sbr.rel (%p213) target = $region16
        $region15: #{tpu_custom_call.1} parent=11 // pred_region
          %s217 = ssub.s32 3072, 3072
          %218 = vsyncadd [#allocation7], %s217
          %s219 = sshll.u32 [#allocation6], 4
          %s220 = int_to_ptr.vmem [resolvable:$true] %s219
          %225 = dma.hbm_to_vmem [thread:$0]  %s1, 3072, %s220, [#allocation7], 64, 64, 4
        $region16: #{tpu_custom_call.1} parent=11 // pred_fallthru
          _
        // Predicated region
        $region17: #{tpu_custom_call.1} parent=11 // pred_check
          %p226 = pneg %p88
        $region18: #{tpu_custom_call.1} parent=11 // pred_check_branch
          %228 = sbr.rel (%p226) target = $region20
        $region19: #{tpu_custom_call.1} parent=11 // pred_region
          _
        $region20: #{tpu_custom_call.1} parent=11 // pred_fallthru
          _
        // Predicated region
        $region21: #{tpu_custom_call.1} parent=11 // pred_check
          %p229 = pneg %p109
        $region22: #{tpu_custom_call.1} parent=11 // pred_check_branch
          %231 = sbr.rel (%p229) target = $region24
        $region23: #{tpu_custom_call.1} parent=11 // pred_region
          %s233 = ssub.s32 3072, 3072
          %234 = vsyncadd [#allocation7], %s233
          %s235 = sshll.u32 [#allocation8], 4
          %s236 = int_to_ptr.vmem [resolvable:$true] %s235
          %241 = dma.hbm_to_vmem [thread:$0]  %s3, 3072, %s236, [#allocation7], 64, 64, 4
        $region24: #{tpu_custom_call.1} parent=11 // pred_fallthru
          _
        // Predicated region
        $region25: #{tpu_custom_call.1} parent=11 // pred_check
          %p242 = pneg %p130
        $region26: #{tpu_custom_call.1} parent=11 // pred_check_branch
          %244 = sbr.rel (%p242) target = $region28
        $region27: #{tpu_custom_call.1} parent=11 // pred_region
          _
        $region28: #{tpu_custom_call.1} parent=11 // pred_fallthru
          _
        // Predicated region
        $region29: #{tpu_custom_call.1} parent=11 // pred_check
          %p245 = pneg %p151
        $region30: #{tpu_custom_call.1} parent=11 // pred_check_branch
          %247 = sbr.rel (%p245) target = $region32
        $region31: #{tpu_custom_call.1} parent=11 // pred_region
          _
        $region32: #{tpu_custom_call.1} parent=11 // pred_fallthru
          _
        // Predicated region
        $region33: #{tpu_custom_call.1} parent=11 // pred_check
          %p248 = pneg %p172
        $region34: #{tpu_custom_call.1} parent=11 // pred_check_branch
          %250 = sbr.rel (%p248) target = $region36
        $region35: #{tpu_custom_call.1} parent=11 // pred_region
          _
        $region36: #{tpu_custom_call.1} parent=11 // pred_fallthru
          _
      $region12: #{tpu_custom_call.1} parent=5 // pred_fallthru
        _
      %p251 = scmp.lt.s32.totalorder %s20, 2
      // Predicated region
      $region37: #{tpu_custom_call.1} parent=5 // pred_check
        %p252 = pneg %p251
      $region38: #{tpu_custom_call.1} parent=5 // pred_check_branch
        %254 = sbr.rel (%p252) target = $region40
      $region39: #{tpu_custom_call.1} parent=5 // pred_region
        // Predicated region
        $region41: #{tpu_custom_call.1} parent=39 // pred_check
          %p255 = pneg %p40
        $region42: #{tpu_custom_call.1} parent=39 // pred_check_branch
          %257 = sbr.rel (%p255) target = $region44
        $region43: #{tpu_custom_call.1} parent=39 // pred_region
          %s258 = sand.u32 %s30, 1
          %s259 = scalar_lea.sflag [#allocation4], %s258
          %s260 = sand.u32 %s30, 1
          %s261 = smul.addr %s260, 64
          %s262 = scalar_lea.vmem [#allocation3], %s261
          %s264 = ssub.s32 1024, 1024
          %265 = vsyncadd %s259, %s264
          %s266 = smul.addr %s20, 16
          %s267 = smul.addr %s266, 64
          %s268 = scalar_lea.hbm %s0, %s267
          %s269 = sshll.u32 %s262, 4
          %s270 = int_to_ptr.vmem [resolvable:$true] %s269
          %275 = dma.hbm_to_vmem [thread:$0]  %s268, 1024, %s270, %s259, 64, 64, 4
        $region44: #{tpu_custom_call.1} parent=39 // pred_fallthru
          _
      $region40: #{tpu_custom_call.1} parent=5 // pred_fallthru
        _
      %p276 = scmp.le.s32.totalorder 1, %s20
      %p277 = scmp.lt.s32.totalorder %s20, 3
      %p278 = pnand %p276, %p277
      %p279 = pneg %p278
      // Predicated region
      $region45: #{tpu_custom_call.1} parent=5 // pred_check
        _
      $region46: #{tpu_custom_call.1} parent=5 // pred_check_branch
        %281 = sbr.rel (%p278) target = $region48
      $region47: #{tpu_custom_call.1} parent=5 // pred_region
        %s282 = ssub.s32 %s20, 1
        %s283 = sand.u32 %s33, 1
        %s284 = scalar_lea.sflag [#allocation4], %s283
        %s285 = sand.u32 %s33, 1
        %s286 = smul.addr %s285, 64
        %s287 = scalar_lea.vmem [#allocation3], %s286
        // Predicated region
        $region49: #{tpu_custom_call.1} parent=47 // pred_check
          %p288 = pneg %p46
        $region50: #{tpu_custom_call.1} parent=47 // pred_check_branch
          %290 = sbr.rel (%p288) target = $region52
        $region51: #{tpu_custom_call.1} parent=47 // pred_region
          %291 = dma.done %s284, 1024
        $region52: #{tpu_custom_call.1} parent=47 // pred_fallthru
          _
        // Predicated region
        $region53: #{tpu_custom_call.1} parent=47 // pred_check
          %p292 = pneg %p67
        $region54: #{tpu_custom_call.1} parent=47 // pred_check_branch
          %294 = sbr.rel (%p292) target = $region56
        $region55: #{tpu_custom_call.1} parent=47 // pred_region
          %295 = dma.done [#allocation7], 3072
        $region56: #{tpu_custom_call.1} parent=47 // pred_fallthru
          _
        // Predicated region
        $region57: #{tpu_custom_call.1} parent=47 // pred_check
          %p296 = pneg %p109
        $region58: #{tpu_custom_call.1} parent=47 // pred_check_branch
          %298 = sbr.rel (%p296) target = $region60
        $region59: #{tpu_custom_call.1} parent=47 // pred_region
          %299 = dma.done [#allocation7], 3072
        $region60: #{tpu_custom_call.1} parent=47 // pred_fallthru
          _
        %s300 = sand.u32 %s33, 1
        %s301 = scalar_lea.sflag [#allocation4], %s300
        %s302 = sand.u32 %s33, 1
        %s303 = smul.addr %s302, 64
        %s304 = scalar_lea.vmem [#allocation3], %s303
        %p305 = pneg %p46
        %p306 = pneg %p43
        %p307 = pneg %p67
        %p308 = pneg %p64
        %p309 = pneg %p88
        %p310 = pneg %p85
        %p311 = pneg %p109
        %p312 = pneg %p106
        %p313 = pneg %p130
        %p314 = pneg %p127
        %p315 = pneg %p151
        %p316 = pneg %p148
        %p317 = pneg %p172
        %p318 = pneg %p169
        %p319 = pneg %p198
        %p320 = pneg %p195
        %s321 = sand.u32 %s185, 1
        %s322 = scalar_lea.sflag [#allocation5], %s321
        %s323 = sand.u32 %s185, 1
        %s324 = smul.addr %s323, 64
        %s325 = scalar_lea.vmem [#allocation9], %s324
        %v327 = vld [vmem:[%s287] sm:$0xf]
        %v328 = vld [vmem:[%s287 + $0x4] sm:$0xf]
        %v329 = vld [vmem:[%s287 + $0x8] sm:$0xf]
        %v330 = vld [vmem:[%s287 + $0xc] sm:$0xf]
        %v331 = vld [vmem:[%s287 + $0x10] sm:$0xf]
        %v332 = vld [vmem:[%s287 + $0x14] sm:$0xf]
        %v333 = vld [vmem:[%s287 + $0x18] sm:$0xf]
        %v334 = vld [vmem:[%s287 + $0x1c] sm:$0xf]
        %v335 = vld [vmem:[%s287 + $0x20] sm:$0xf]
        %v336 = vld [vmem:[%s287 + $0x24] sm:$0xf]
        %v337 = vld [vmem:[%s287 + $0x28] sm:$0xf]
        %v338 = vld [vmem:[%s287 + $0x2c] sm:$0xf]
        %v339 = vld [vmem:[%s287 + $0x30] sm:$0xf]
        %v340 = vld [vmem:[%s287 + $0x34] sm:$0xf]
        %v341 = vld [vmem:[%s287 + $0x10] sm:$0xf]
        %v342 = vld [vmem:[%s287 + $0x14] sm:$0xf]
        %v343 = vld [vmem:[%s287 + $0x18] sm:$0xf]
        %v344 = vld [vmem:[%s287 + $0x1c] sm:$0xf]
        %v345 = vld [vmem:[%s287 + $0x20] sm:$0xf]
        %v346 = vld [vmem:[%s287 + $0x24] sm:$0xf]
        %v347 = vld [vmem:[%s287 + $0x28] sm:$0xf]
        %v348 = vld [vmem:[%s287 + $0x2c] sm:$0xf]
        %v349 = vld [vmem:[%s287 + $0x30] sm:$0xf]
        %v350 = vld [vmem:[%s287 + $0x34] sm:$0xf]
        %v351 = vld [vmem:[%s287 + $0x38] sm:$0xf]
        %v352 = vld [vmem:[%s287 + $0x3c] sm:$0xf]
        %v365 = vunpack.c.l.b16 %v327
        %v366 = vunpack.c.l.b16 %v328
        %v367 = vunpack.c.l.b16 %v329
        %v368 = vunpack.c.l.b16 %v330
        %v369 = vunpack.c.l.b16 %v331
        %v370 = vunpack.c.l.b16 %v332
        %v371 = vunpack.c.l.b16 %v333
        %v372 = vunpack.c.l.b16 %v334
        %v373 = vunpack.c.l.b16 %v335
        %v374 = vunpack.c.l.b16 %v336
        %v375 = vunpack.c.l.b16 %v337
        %v376 = vunpack.c.l.b16 %v338
        %v377 = vpack.c.b16 %v366, %v365
        %v378 = vpack.c.b16 %v368, %v367
        %v379 = vpack.c.b16 %v370, %v369
        %v380 = vpack.c.b16 %v372, %v371
        %v381 = vpack.c.b16 %v374, %v373
        %v382 = vpack.c.b16 %v376, %v375
        %v391 = vunpack.c.l.b16 %v339
        %v392 = vunpack.c.l.b16 %v340
        %v393 = vpack.c.b16 %v392, %v391
        %v407 = vunpack.c.l.b16 %v341
        %v408 = vunpack.c.l.b16 %v342
        %v409 = vunpack.c.l.b16 %v343
        %v410 = vunpack.c.l.b16 %v344
        %v411 = vunpack.c.l.b16 %v345
        %v412 = vunpack.c.l.b16 %v346
        %v413 = vunpack.c.l.b16 %v347
        %v414 = vunpack.c.l.b16 %v348
        %v415 = vunpack.c.l.b16 %v349
        %v416 = vunpack.c.l.b16 %v350
        %v417 = vunpack.c.l.b16 %v351
        %v418 = vunpack.c.l.b16 %v352
        %v419 = vpack.c.b16 %v408, %v407
        %v420 = vpack.c.b16 %v410, %v409
        %v421 = vpack.c.b16 %v412, %v411
        %v422 = vpack.c.b16 %v414, %v413
        %v423 = vpack.c.b16 %v416, %v415
        %v424 = vpack.c.b16 %v418, %v417
        %v431 = vld [vmem:[#allocation6] sm:$0xf]
        %v432 = vld [vmem:[#allocation6 + $0x4] sm:$0xf]
        %v433 = vld [vmem:[#allocation6 + $0x8] sm:$0xf]
        %v434 = vld [vmem:[#allocation6 + $0xc] sm:$0xf]
        %v435 = vld [vmem:[#allocation6 + $0x10] sm:$0xf]
        %v436 = vld [vmem:[#allocation6 + $0x14] sm:$0xf]
        %v437 = vld [vmem:[#allocation6 + $0x18] sm:$0xf]
        %v438 = vld [vmem:[#allocation6 + $0x1c] sm:$0xf]
        %v439 = vld [vmem:[#allocation6 + $0x20] sm:$0xf]
        %v440 = vld [vmem:[#allocation6 + $0x24] sm:$0xf]
        %v441 = vld [vmem:[#allocation6 + $0x28] sm:$0xf]
        %v442 = vld [vmem:[#allocation6 + $0x2c] sm:$0xf]
        %v443 = vld [vmem:[#allocation6 + $0x30] sm:$0xf]
        %v444 = vld [vmem:[#allocation6 + $0x34] sm:$0xf]
        %v445 = vld [vmem:[#allocation6 + $0x38] sm:$0xf]
        %v446 = vld [vmem:[#allocation6 + $0x3c] sm:$0xf]
        %v447 = vld [vmem:[#allocation6 + $0x40] sm:$0xf]
        %v448 = vld [vmem:[#allocation6 + $0x44] sm:$0xf]
        %v449 = vld [vmem:[#allocation6 + $0x48] sm:$0xf]
        %v450 = vld [vmem:[#allocation6 + $0x4c] sm:$0xf]
        %v451 = vld [vmem:[#allocation6 + $0x50] sm:$0xf]
        %v452 = vld [vmem:[#allocation6 + $0x54] sm:$0xf]
        %v453 = vld [vmem:[#allocation6 + $0x58] sm:$0xf]
        %v454 = vld [vmem:[#allocation6 + $0x5c] sm:$0xf]
        %v455 = vld [vmem:[#allocation6 + $0x60] sm:$0xf]
        %v456 = vld [vmem:[#allocation6 + $0x64] sm:$0xf]
        %v457 = vld [vmem:[#allocation6 + $0x68] sm:$0xf]
        %v458 = vld [vmem:[#allocation6 + $0x6c] sm:$0xf]
        %v459 = vld [vmem:[#allocation6 + $0x70] sm:$0xf]
        %v460 = vld [vmem:[#allocation6 + $0x74] sm:$0xf]
        %v461 = vld [vmem:[#allocation6 + $0x78] sm:$0xf]
        %v462 = vld [vmem:[#allocation6 + $0x7c] sm:$0xf]
        %v463 = vld [vmem:[#allocation6 + $0x80] sm:$0xf]
        %v464 = vld [vmem:[#allocation6 + $0x84] sm:$0xf]
        %v465 = vld [vmem:[#allocation6 + $0x88] sm:$0xf]
        %v466 = vld [vmem:[#allocation6 + $0x8c] sm:$0xf]
        %v467 = vld [vmem:[#allocation6 + $0x90] sm:$0xf]
        %v468 = vld [vmem:[#allocation6 + $0x94] sm:$0xf]
        %v469 = vld [vmem:[#allocation6 + $0x98] sm:$0xf]
        %v470 = vld [vmem:[#allocation6 + $0x9c] sm:$0xf]
        %v471 = vld [vmem:[#allocation6 + $0xa0] sm:$0xf]
        %v472 = vld [vmem:[#allocation6 + $0xa4] sm:$0xf]
        %v473 = vld [vmem:[#allocation6 + $0xa8] sm:$0xf]
        %v474 = vld [vmem:[#allocation6 + $0xac] sm:$0xf]
        %v475 = vld [vmem:[#allocation6 + $0xb0] sm:$0xf]
        %v476 = vld [vmem:[#allocation6 + $0xb4] sm:$0xf]
        %v477 = vld [vmem:[#allocation6 + $0xb8] sm:$0xf]
        %v478 = vld [vmem:[#allocation6 + $0xbc] sm:$0xf]
        %v479 = vld [vmem:[%s2] sm:$0x1]
        %v481 = vlaneseq
        %v482 = vshrl.u32 %v481, 7
        %v483 = vsub.s32 0, %v482
        %v484 = vrot.slane %v479, %v483
        %v534 = vunpack.c.l.b16 %v431
        %v535 = vunpack.c.l.b16 %v432
        %v536 = vunpack.c.l.b16 %v433
        %v537 = vunpack.c.l.b16 %v434
        %v538 = vunpack.c.l.b16 %v435
        %v539 = vunpack.c.l.b16 %v436
        %v540 = vunpack.c.l.b16 %v437
        %v541 = vunpack.c.l.b16 %v438
        %v542 = vunpack.c.l.b16 %v439
        %v543 = vunpack.c.l.b16 %v440
        %v544 = vunpack.c.l.b16 %v441
        %v545 = vunpack.c.l.b16 %v442
        %v546 = vunpack.c.l.b16 %v443
        %v547 = vunpack.c.l.b16 %v444
        %v548 = vunpack.c.l.b16 %v445
        %v549 = vunpack.c.l.b16 %v446
        %v550 = vunpack.c.l.b16 %v447
        %v551 = vunpack.c.l.b16 %v448
        %v552 = vunpack.c.l.b16 %v449
        %v553 = vunpack.c.l.b16 %v450
        %v554 = vunpack.c.l.b16 %v451
        %v555 = vunpack.c.l.b16 %v452
        %v556 = vunpack.c.l.b16 %v453
        %v557 = vunpack.c.l.b16 %v454
        %v558 = vunpack.c.l.b16 %v455
        %v559 = vunpack.c.l.b16 %v456
        %v560 = vunpack.c.l.b16 %v457
        %v561 = vunpack.c.l.b16 %v458
        %v562 = vunpack.c.l.b16 %v459
        %v563 = vunpack.c.l.b16 %v460
        %v564 = vunpack.c.l.b16 %v461
        %v565 = vunpack.c.l.b16 %v462
        %v566 = vunpack.c.l.b16 %v463
        %v567 = vunpack.c.l.b16 %v464
        %v568 = vunpack.c.l.b16 %v465
        %v569 = vunpack.c.l.b16 %v466
        %v570 = vunpack.c.l.b16 %v467
        %v571 = vunpack.c.l.b16 %v468
        %v572 = vunpack.c.l.b16 %v469
        %v573 = vunpack.c.l.b16 %v470
        %v574 = vunpack.c.l.b16 %v471
        %v575 = vunpack.c.l.b16 %v472
        %v576 = vunpack.c.l.b16 %v473
        %v577 = vunpack.c.l.b16 %v474
        %v578 = vunpack.c.l.b16 %v475
        %v579 = vunpack.c.l.b16 %v476
        %v580 = vunpack.c.l.b16 %v477
        %v581 = vunpack.c.l.b16 %v478
        %v582 = vpack.c.b16 %v535, %v534
        %v583 = vpack.c.b16 %v537, %v536
        %v584 = vpack.c.b16 %v539, %v538
        %v585 = vpack.c.b16 %v541, %v540
        %v586 = vpack.c.b16 %v543, %v542
        %v587 = vpack.c.b16 %v545, %v544
        %v588 = vpack.c.b16 %v547, %v546
        %v589 = vpack.c.b16 %v549, %v548
        %v590 = vpack.c.b16 %v551, %v550
        %v591 = vpack.c.b16 %v553, %v552
        %v592 = vpack.c.b16 %v555, %v554
        %v593 = vpack.c.b16 %v557, %v556
        %v594 = vpack.c.b16 %v559, %v558
        %v595 = vpack.c.b16 %v561, %v560
        %v596 = vpack.c.b16 %v563, %v562
        %v597 = vpack.c.b16 %v565, %v564
        %v598 = vpack.c.b16 %v567, %v566
        %v599 = vpack.c.b16 %v569, %v568
        %v600 = vpack.c.b16 %v571, %v570
        %v601 = vpack.c.b16 %v573, %v572
        %v602 = vpack.c.b16 %v575, %v574
        %v603 = vpack.c.b16 %v577, %v576
        %v604 = vpack.c.b16 %v579, %v578
        %v605 = vpack.c.b16 %v581, %v580
        %630 = vmatprep.subr.bf16.mxu0 0
        %631 = vmatpush1.bf16.msra.mxu0 %v582
        %632 = vmatprep.subr.bf16.mxu0 0
        %633 = vmatpush1.bf16.msra.mxu0 %v583
        %634 = vmatprep.subr.bf16.mxu0 0
        %635 = vmatpush1.bf16.msra.mxu0 %v584
        %636 = vmatprep.subr.bf16.mxu0 0
        %637 = vmatpush1.bf16.msra.mxu0 %v585
        %638 = vmatprep.subr.bf16.mxu0 0
        %639 = vmatpush1.bf16.msra.mxu0 %v586
        %640 = vmatprep.subr.bf16.mxu0 0
        %641 = vmatpush1.bf16.msra.mxu0 %v587
        %642 = vmatprep.subr.bf16.mxu0 0
        %643 = vmatpush1.bf16.msra.mxu0 %v588
        %644 = vmatprep.subr.bf16.mxu0 0
        %645 = vmatpush1.bf16.msra.mxu0 %v589
        %646 = vmatprep.subr.bf16.mxu0 0
        %647 = vmatpush1.bf16.msra.mxu0 %v590
        %648 = vmatprep.subr.bf16.mxu0 0
        %649 = vmatpush1.bf16.msra.mxu0 %v591
        %650 = vmatprep.subr.bf16.mxu0 0
        %651 = vmatpush1.bf16.msra.mxu0 %v592
        %652 = vmatprep.subr.bf16.mxu0 0
        %653 = vmatpush1.bf16.msra.mxu0 %v593
        %654 = vmatprep.subr.bf16.mxu0 0
        %655 = vmatpush1.bf16.msra.mxu0 %v594
        %656 = vmatprep.subr.bf16.mxu0 0
        %657 = vmatpush1.bf16.msra.mxu0 %v595
        %658 = vmatprep.subr.bf16.mxu0 0
        %659 = vmatpush1.bf16.msra.mxu0 %v596
        %660 = vmatprep.subr.bf16.mxu0 0
        %661 = vmatpush1.bf16.msra.mxu0 %v597
        %662 = vmatprep.mubr.bf16.mxu0 %v378
        %663 = vmatmul.mubr.bf16.gmra.mrb[0].mxu0 %v377
        %v664 = vpop.f32.mrb[0].mxu0
        %v665 = vadd.f32 %v484, %v664
        %v666 = vpop.f32.mrb[0].mxu0
        %v667 = vpop.f32.mrb[0].mxu0
        %v668 = vadd.f32 %v484, %v667
        %v669 = vpop.f32.mrb[0].mxu0
        %670 = vmatprep.mubr.bf16.mxu0 %v379
        %671 = vmatmul.mubr.bf16.gmra.mrb[0].mxu0 %v378
        %v672 = vpop.f32.mrb[0].mxu0
        %v673 = vadd.f32 %v484, %v672
        %v674 = vpop.f32.mrb[0].mxu0
        %v675 = vpop.f32.mrb[0].mxu0
        %v676 = vadd.f32 %v484, %v675
        %v677 = vpop.f32.mrb[0].mxu0
        %678 = vmatprep.mubr.bf16.mxu0 %v380
        %679 = vmatmul.mubr.bf16.gmra.mrb[0].mxu0 %v379
        %v680 = vpop.f32.mrb[0].mxu0
        %v681 = vadd.f32 %v484, %v680
        %v682 = vpop.f32.mrb[0].mxu0
        %v683 = vpop.f32.mrb[0].mxu0
        %v684 = vadd.f32 %v484, %v683
        %v685 = vpop.f32.mrb[0].mxu0
        %686 = vmatprep.mubr.bf16.mxu0 %v381
        %687 = vmatmul.mubr.bf16.gmra.mrb[0].mxu0 %v380
        %v688 = vpop.f32.mrb[0].mxu0
        %v689 = vadd.f32 %v484, %v688
        %v690 = vpop.f32.mrb[0].mxu0
        %v691 = vpop.f32.mrb[0].mxu0
        %v692 = vadd.f32 %v484, %v691
        %v693 = vpop.f32.mrb[0].mxu0
        %694 = vmatprep.mubr.bf16.mxu0 %v382
        %695 = vmatmul.mubr.bf16.gmra.mrb[0].mxu0 %v381
        %v696 = vpop.f32.mrb[0].mxu0
        %v697 = vadd.f32 %v484, %v696
        %v698 = vpop.f32.mrb[0].mxu0
        %v699 = vpop.f32.mrb[0].mxu0
        %v700 = vadd.f32 %v484, %v699
        %v701 = vpop.f32.mrb[0].mxu0
        %702 = vmatprep.mubr.bf16.mxu0 %v393
        %703 = vmatmul.mubr.bf16.gmra.mrb[0].mxu0 %v382
        %v704 = vpop.f32.mrb[0].mxu0
        %v705 = vadd.f32 %v484, %v704
        %v706 = vpop.f32.mrb[0].mxu0
        %v707 = vpop.f32.mrb[0].mxu0
        %v708 = vadd.f32 %v484, %v707
        %v709 = vpop.f32.mrb[0].mxu0
        %710 = vdwg.mxu0
        %711 = vmatprep.subr.bf16.mxu0 0
        %712 = vmatpush1.bf16.msra.mxu0 %v598
        %713 = vmatprep.subr.bf16.mxu0 0
        %714 = vmatpush1.bf16.msra.mxu0 %v599
        %715 = vmatprep.subr.bf16.mxu0 0
        %716 = vmatpush1.bf16.msra.mxu0 %v600
        %717 = vmatprep.subr.bf16.mxu0 0
        %718 = vmatpush1.bf16.msra.mxu0 %v601
        %719 = vmatprep.subr.bf16.mxu0 0
        %720 = vmatpush1.bf16.msra.mxu0 %v602
        %721 = vmatprep.subr.bf16.mxu0 0
        %722 = vmatpush1.bf16.msra.mxu0 %v603
        %723 = vmatprep.subr.bf16.mxu0 0
        %724 = vmatpush1.bf16.msra.mxu0 %v604
        %725 = vmatprep.subr.bf16.mxu0 0
        %726 = vmatpush1.bf16.msra.mxu0 %v605
        %727 = vmatprep.subr.bf16.mxu0 0
        %728 = vmatpush1.bf16.msra.mxu0 0
        %729 = vmatprep.subr.bf16.mxu0 0
        %730 = vmatpush1.bf16.msra.mxu0 0
        %731 = vmatprep.subr.bf16.mxu0 0
        %732 = vmatpush1.bf16.msra.mxu0 0
        %733 = vmatprep.subr.bf16.mxu0 0
        %734 = vmatpush1.bf16.msra.mxu0 0
        %735 = vmatprep.subr.bf16.mxu0 0
        %736 = vmatpush1.bf16.msra.mxu0 0
        %737 = vmatprep.subr.bf16.mxu0 0
        %738 = vmatpush1.bf16.msra.mxu0 0
        %739 = vmatprep.subr.bf16.mxu0 0
        %740 = vmatpush1.bf16.msra.mxu0 0
        %741 = vmatprep.subr.bf16.mxu0 0
        %742 = vmatpush1.bf16.msra.mxu0 0
        %743 = vmatprep.mubr.bf16.mxu0 0
        %744 = vmatmul.mubr.bf16.gmra.mrb[0].mxu0 %v419
        %v745 = vpop.f32.mrb[0].mxu0
        %v746 = vadd.f32 %v665, %v745
        %v747 = vpop.f32.mrb[0].mxu0
        %v748 = vpop.f32.mrb[0].mxu0
        %v749 = vadd.f32 %v668, %v748
        %v750 = vpop.f32.mrb[0].mxu0
        %751 = vmatprep.mubr.bf16.mxu0 0
        %752 = vmatmul.mubr.bf16.gmra.mrb[0].mxu0 %v420
        %v753 = vpop.f32.mrb[0].mxu0
        %v754 = vadd.f32 %v673, %v753
        %v755 = vpop.f32.mrb[0].mxu0
        %v756 = vpop.f32.mrb[0].mxu0
        %v757 = vadd.f32 %v676, %v756
        %v758 = vpop.f32.mrb[0].mxu0
        %759 = vmatprep.mubr.bf16.mxu0 0
        %760 = vmatmul.mubr.bf16.gmra.mrb[0].mxu0 %v421
        %v761 = vpop.f32.mrb[0].mxu0
        %v762 = vadd.f32 %v681, %v761
        %v763 = vpop.f32.mrb[0].mxu0
        %v764 = vpop.f32.mrb[0].mxu0
        %v765 = vadd.f32 %v684, %v764
        %v766 = vpop.f32.mrb[0].mxu0
        %767 = vmatprep.mubr.bf16.mxu0 0
        %768 = vmatmul.mubr.bf16.gmra.mrb[0].mxu0 %v422
        %v769 = vpop.f32.mrb[0].mxu0
        %v770 = vadd.f32 %v689, %v769
        %v771 = vpop.f32.mrb[0].mxu0
        %v772 = vpop.f32.mrb[0].mxu0
        %v773 = vadd.f32 %v692, %v772
        %v774 = vpop.f32.mrb[0].mxu0
        %775 = vmatprep.mubr.bf16.mxu0 0
        %776 = vmatmul.mubr.bf16.gmra.mrb[0].mxu0 %v423
        %v777 = vpop.f32.mrb[0].mxu0
        %v778 = vadd.f32 %v697, %v777
        %v779 = vpop.f32.mrb[0].mxu0
        %v780 = vpop.f32.mrb[0].mxu0
        %v781 = vadd.f32 %v700, %v780
        %v782 = vpop.f32.mrb[0].mxu0
        %783 = vmatprep.mubr.bf16.mxu0 0
        %784 = vmatmul.mubr.bf16.gmra.mrb[0].mxu0 %v424
        %v785 = vpop.f32.mrb[0].mxu0
        %v786 = vadd.f32 %v705, %v785
        %v787 = vpop.f32.mrb[0].mxu0
        %v788 = vpop.f32.mrb[0].mxu0
        %v789 = vadd.f32 %v708, %v788
        %v790 = vpop.f32.mrb[0].mxu0
        %791 = vdwg.mxu0
        %v792 = vmax.f32 %v746, 0.0
        %v793 = vmax.f32 %v749, 0.0
        %v794 = vmax.f32 %v754, 0.0
        %v795 = vmax.f32 %v757, 0.0
        %v796 = vmax.f32 %v762, 0.0
        %v797 = vmax.f32 %v765, 0.0
        %v798 = vmax.f32 %v770, 0.0
        %v799 = vmax.f32 %v773, 0.0
        %v800 = vmax.f32 %v778, 0.0
        %v801 = vmax.f32 %v781, 0.0
        %v802 = vmax.f32 %v786, 0.0
        %v803 = vmax.f32 %v789, 0.0
        %v804 = vpack.c.bf16 %v793, %v792
        %v805 = vpack.c.bf16 %v795, %v794
        %v806 = vpack.c.bf16 %v797, %v796
        %v807 = vpack.c.bf16 %v799, %v798
        %v808 = vpack.c.bf16 %v801, %v800
        %v809 = vpack.c.bf16 %v803, %v802
        %810 = vst [vmem:[#allocation2] sm:$0xff] %v804
        %811 = vst [vmem:[#allocation2 + $0x8] sm:$0xff] %v805
        %812 = vst [vmem:[#allocation2 + $0x10] sm:$0xff] %v806
        %813 = vst [vmem:[#allocation2 + $0x18] sm:$0xff] %v807
        %814 = vst [vmem:[#allocation2 + $0x20] sm:$0xff] %v808
        %815 = vst [vmem:[#allocation2 + $0x28] sm:$0xff] %v809
        %v816 = vld [vmem:[#allocation2] sm:$0xff]
        %v817 = vld [vmem:[#allocation2 + $0x8] sm:$0xff]
        %v818 = vld [vmem:[#allocation2 + $0x10] sm:$0xff]
        %v819 = vld [vmem:[#allocation2 + $0x18] sm:$0xff]
        %v820 = vld [vmem:[#allocation2 + $0x20] sm:$0xff]
        %v821 = vld [vmem:[#allocation2 + $0x10] sm:$0xff]
        %v822 = vld [vmem:[#allocation2 + $0x18] sm:$0xff]
        %v823 = vld [vmem:[#allocation2 + $0x20] sm:$0xff]
        %v824 = vld [vmem:[#allocation2 + $0x28] sm:$0xff]
        %v825 = vld [vmem:[#allocation8] sm:$0xf]
        %v826 = vld [vmem:[#allocation8 + $0x4] sm:$0xf]
        %v827 = vld [vmem:[#allocation8 + $0x8] sm:$0xf]
        %v828 = vld [vmem:[#allocation8 + $0xc] sm:$0xf]
        %v829 = vld [vmem:[#allocation8 + $0x10] sm:$0xf]
        %v830 = vld [vmem:[#allocation8 + $0x14] sm:$0xf]
        %v831 = vld [vmem:[#allocation8 + $0x18] sm:$0xf]
        %v832 = vld [vmem:[#allocation8 + $0x1c] sm:$0xf]
        %v833 = vld [vmem:[#allocation8 + $0x20] sm:$0xf]
        %v834 = vld [vmem:[#allocation8 + $0x24] sm:$0xf]
        %v835 = vld [vmem:[#allocation8 + $0x28] sm:$0xf]
        %v836 = vld [vmem:[#allocation8 + $0x2c] sm:$0xf]
        %v837 = vld [vmem:[#allocation8 + $0x30] sm:$0xf]
        %v838 = vld [vmem:[#allocation8 + $0x34] sm:$0xf]
        %v839 = vld [vmem:[#allocation8 + $0x38] sm:$0xf]
        %v840 = vld [vmem:[#allocation8 + $0x3c] sm:$0xf]
        %v841 = vld [vmem:[#allocation8 + $0x40] sm:$0xf]
        %v842 = vld [vmem:[#allocation8 + $0x44] sm:$0xf]
        %v843 = vld [vmem:[#allocation8 + $0x48] sm:$0xf]
        %v844 = vld [vmem:[#allocation8 + $0x4c] sm:$0xf]
        %v845 = vld [vmem:[#allocation8 + $0x50] sm:$0xf]
        %v846 = vld [vmem:[#allocation8 + $0x54] sm:$0xf]
        %v847 = vld [vmem:[#allocation8 + $0x58] sm:$0xf]
        %v848 = vld [vmem:[#allocation8 + $0x5c] sm:$0xf]
        %v849 = vld [vmem:[#allocation8 + $0x60] sm:$0xf]
        %v850 = vld [vmem:[#allocation8 + $0x64] sm:$0xf]
        %v851 = vld [vmem:[#allocation8 + $0x68] sm:$0xf]
        %v852 = vld [vmem:[#allocation8 + $0x6c] sm:$0xf]
        %v853 = vld [vmem:[#allocation8 + $0x70] sm:$0xf]
        %v854 = vld [vmem:[#allocation8 + $0x74] sm:$0xf]
        %v855 = vld [vmem:[#allocation8 + $0x78] sm:$0xf]
        %v856 = vld [vmem:[#allocation8 + $0x7c] sm:$0xf]
        %v857 = vld [vmem:[#allocation8 + $0x80] sm:$0xf]
        %v858 = vld [vmem:[#allocation8 + $0x84] sm:$0xf]
        %v859 = vld [vmem:[#allocation8 + $0x88] sm:$0xf]
        %v860 = vld [vmem:[#allocation8 + $0x8c] sm:$0xf]
        %v861 = vld [vmem:[#allocation8 + $0x90] sm:$0xf]
        %v862 = vld [vmem:[#allocation8 + $0x94] sm:$0xf]
        %v863 = vld [vmem:[#allocation8 + $0x98] sm:$0xf]
        %v864 = vld [vmem:[#allocation8 + $0x9c] sm:$0xf]
        %v865 = vld [vmem:[#allocation8 + $0xa0] sm:$0xf]
        %v866 = vld [vmem:[#allocation8 + $0xa4] sm:$0xf]
        %v867 = vld [vmem:[#allocation8 + $0xa8] sm:$0xf]
        %v868 = vld [vmem:[#allocation8 + $0xac] sm:$0xf]
        %v869 = vld [vmem:[#allocation8 + $0xb0] sm:$0xf]
        %v870 = vld [vmem:[#allocation8 + $0xb4] sm:$0xf]
        %v871 = vld [vmem:[#allocation8 + $0xb8] sm:$0xf]
        %v872 = vld [vmem:[#allocation8 + $0xbc] sm:$0xf]
        %v873 = vld [vmem:[%s4] sm:$0x1]
        %v875 = vlaneseq
        %v876 = vshrl.u32 %v875, 7
        %v877 = vsub.s32 0, %v876
        %v878 = vrot.slane %v873, %v877
        %v928 = vunpack.c.l.b16 %v825
        %v929 = vunpack.c.l.b16 %v826
        %v930 = vunpack.c.l.b16 %v827
        %v931 = vunpack.c.l.b16 %v828
        %v932 = vunpack.c.l.b16 %v829
        %v933 = vunpack.c.l.b16 %v830
        %v934 = vunpack.c.l.b16 %v831
        %v935 = vunpack.c.l.b16 %v832
        %v936 = vunpack.c.l.b16 %v833
        %v937 = vunpack.c.l.b16 %v834
        %v938 = vunpack.c.l.b16 %v835
        %v939 = vunpack.c.l.b16 %v836
        %v940 = vunpack.c.l.b16 %v837
        %v941 = vunpack.c.l.b16 %v838
        %v942 = vunpack.c.l.b16 %v839
        %v943 = vunpack.c.l.b16 %v840
        %v944 = vunpack.c.l.b16 %v841
        %v945 = vunpack.c.l.b16 %v842
        %v946 = vunpack.c.l.b16 %v843
        %v947 = vunpack.c.l.b16 %v844
        %v948 = vunpack.c.l.b16 %v845
        %v949 = vunpack.c.l.b16 %v846
        %v950 = vunpack.c.l.b16 %v847
        %v951 = vunpack.c.l.b16 %v848
        %v952 = vunpack.c.l.b16 %v849
        %v953 = vunpack.c.l.b16 %v850
        %v954 = vunpack.c.l.b16 %v851
        %v955 = vunpack.c.l.b16 %v852
        %v956 = vunpack.c.l.b16 %v853
        %v957 = vunpack.c.l.b16 %v854
        %v958 = vunpack.c.l.b16 %v855
        %v959 = vunpack.c.l.b16 %v856
        %v960 = vunpack.c.l.b16 %v857
        %v961 = vunpack.c.l.b16 %v858
        %v962 = vunpack.c.l.b16 %v859
        %v963 = vunpack.c.l.b16 %v860
        %v964 = vunpack.c.l.b16 %v861
        %v965 = vunpack.c.l.b16 %v862
        %v966 = vunpack.c.l.b16 %v863
        %v967 = vunpack.c.l.b16 %v864
        %v968 = vunpack.c.l.b16 %v865
        %v969 = vunpack.c.l.b16 %v866
        %v970 = vunpack.c.l.b16 %v867
        %v971 = vunpack.c.l.b16 %v868
        %v972 = vunpack.c.l.b16 %v869
        %v973 = vunpack.c.l.b16 %v870
        %v974 = vunpack.c.l.b16 %v871
        %v975 = vunpack.c.l.b16 %v872
        %v976 = vpack.c.b16 %v929, %v928
        %v977 = vpack.c.b16 %v931, %v930
        %v978 = vpack.c.b16 %v933, %v932
        %v979 = vpack.c.b16 %v935, %v934
        %v980 = vpack.c.b16 %v937, %v936
        %v981 = vpack.c.b16 %v939, %v938
        %v982 = vpack.c.b16 %v941, %v940
        %v983 = vpack.c.b16 %v943, %v942
        %v984 = vpack.c.b16 %v945, %v944
        %v985 = vpack.c.b16 %v947, %v946
        %v986 = vpack.c.b16 %v949, %v948
        %v987 = vpack.c.b16 %v951, %v950
        %v988 = vpack.c.b16 %v953, %v952
        %v989 = vpack.c.b16 %v955, %v954
        %v990 = vpack.c.b16 %v957, %v956
        %v991 = vpack.c.b16 %v959, %v958
        %v992 = vpack.c.b16 %v961, %v960
        %v993 = vpack.c.b16 %v963, %v962
        %v994 = vpack.c.b16 %v965, %v964
        %v995 = vpack.c.b16 %v967, %v966
        %v996 = vpack.c.b16 %v969, %v968
        %v997 = vpack.c.b16 %v971, %v970
        %v998 = vpack.c.b16 %v973, %v972
        %v999 = vpack.c.b16 %v975, %v974
        %1024 = vmatprep.subr.bf16.mxu0 0
        %1025 = vmatpush1.bf16.msra.mxu0 %v976
        %1026 = vmatprep.subr.bf16.mxu0 0
        %1027 = vmatpush1.bf16.msra.mxu0 %v977
        %1028 = vmatprep.subr.bf16.mxu0 0
        %1029 = vmatpush1.bf16.msra.mxu0 %v978
        %1030 = vmatprep.subr.bf16.mxu0 0
        %1031 = vmatpush1.bf16.msra.mxu0 %v979
        %1032 = vmatprep.subr.bf16.mxu0 0
        %1033 = vmatpush1.bf16.msra.mxu0 %v980
        %1034 = vmatprep.subr.bf16.mxu0 0
        %1035 = vmatpush1.bf16.msra.mxu0 %v981
        %1036 = vmatprep.subr.bf16.mxu0 0
        %1037 = vmatpush1.bf16.msra.mxu0 %v982
        %1038 = vmatprep.subr.bf16.mxu0 0
        %1039 = vmatpush1.bf16.msra.mxu0 %v983
        %1040 = vmatprep.subr.bf16.mxu0 0
        %1041 = vmatpush1.bf16.msra.mxu0 %v984
        %1042 = vmatprep.subr.bf16.mxu0 0
        %1043 = vmatpush1.bf16.msra.mxu0 %v985
        %1044 = vmatprep.subr.bf16.mxu0 0
        %1045 = vmatpush1.bf16.msra.mxu0 %v986
        %1046 = vmatprep.subr.bf16.mxu0 0
        %1047 = vmatpush1.bf16.msra.mxu0 %v987
        %1048 = vmatprep.subr.bf16.mxu0 0
        %1049 = vmatpush1.bf16.msra.mxu0 %v988
        %1050 = vmatprep.subr.bf16.mxu0 0
        %1051 = vmatpush1.bf16.msra.mxu0 %v989
        %1052 = vmatprep.subr.bf16.mxu0 0
        %1053 = vmatpush1.bf16.msra.mxu0 %v990
        %1054 = vmatprep.subr.bf16.mxu0 0
        %1055 = vmatpush1.bf16.msra.mxu0 %v991
        %1056 = vmatprep.mubr.bf16.mxu0 %v817
        %1057 = vmatmul.mubr.bf16.gmra.mrb[0].mxu0 %v816
        %v1058 = vpop.f32.mrb[0].mxu0
        %v1059 = vadd.f32 %v878, %v1058
        %v1060 = vpop.f32.mrb[0].mxu0
        %v1061 = vpop.f32.mrb[0].mxu0
        %v1062 = vadd.f32 %v878, %v1061
        %v1063 = vpop.f32.mrb[0].mxu0
        %1064 = vmatprep.mubr.bf16.mxu0 %v818
        %1065 = vmatmul.mubr.bf16.gmra.mrb[0].mxu0 %v817
        %v1066 = vpop.f32.mrb[0].mxu0
        %v1067 = vadd.f32 %v878, %v1066
        %v1068 = vpop.f32.mrb[0].mxu0
        %v1069 = vpop.f32.mrb[0].mxu0
        %v1070 = vadd.f32 %v878, %v1069
        %v1071 = vpop.f32.mrb[0].mxu0
        %1072 = vmatprep.mubr.bf16.mxu0 %v819
        %1073 = vmatmul.mubr.bf16.gmra.mrb[0].mxu0 %v818
        %v1074 = vpop.f32.mrb[0].mxu0
        %v1075 = vadd.f32 %v878, %v1074
        %v1076 = vpop.f32.mrb[0].mxu0
        %v1077 = vpop.f32.mrb[0].mxu0
        %v1078 = vadd.f32 %v878, %v1077
        %v1079 = vpop.f32.mrb[0].mxu0
        %1080 = vmatprep.mubr.bf16.mxu0 %v820
        %1081 = vmatmul.mubr.bf16.gmra.mrb[0].mxu0 %v819
        %v1082 = vpop.f32.mrb[0].mxu0
        %v1083 = vadd.f32 %v878, %v1082
        %v1084 = vpop.f32.mrb[0].mxu0
        %v1085 = vpop.f32.mrb[0].mxu0
        %v1086 = vadd.f32 %v878, %v1085
        %v1087 = vpop.f32.mrb[0].mxu0
        %1088 = vdwg.mxu0
        %1089 = vmatprep.subr.bf16.mxu0 0
        %1090 = vmatpush1.bf16.msra.mxu0 %v992
        %1091 = vmatprep.subr.bf16.mxu0 0
        %1092 = vmatpush1.bf16.msra.mxu0 %v993
        %1093 = vmatprep.subr.bf16.mxu0 0
        %1094 = vmatpush1.bf16.msra.mxu0 %v994
        %1095 = vmatprep.subr.bf16.mxu0 0
        %1096 = vmatpush1.bf16.msra.mxu0 %v995
        %1097 = vmatprep.subr.bf16.mxu0 0
        %1098 = vmatpush1.bf16.msra.mxu0 %v996
        %1099 = vmatprep.subr.bf16.mxu0 0
        %1100 = vmatpush1.bf16.msra.mxu0 %v997
        %1101 = vmatprep.subr.bf16.mxu0 0
        %1102 = vmatpush1.bf16.msra.mxu0 %v998
        %1103 = vmatprep.subr.bf16.mxu0 0
        %1104 = vmatpush1.bf16.msra.mxu0 %v999
        %1105 = vmatprep.subr.bf16.mxu0 0
        %1106 = vmatpush1.bf16.msra.mxu0 0
        %1107 = vmatprep.subr.bf16.mxu0 0
        %1108 = vmatpush1.bf16.msra.mxu0 0
        %1109 = vmatprep.subr.bf16.mxu0 0
        %1110 = vmatpush1.bf16.msra.mxu0 0
        %1111 = vmatprep.subr.bf16.mxu0 0
        %1112 = vmatpush1.bf16.msra.mxu0 0
        %1113 = vmatprep.subr.bf16.mxu0 0
        %1114 = vmatpush1.bf16.msra.mxu0 0
        %1115 = vmatprep.subr.bf16.mxu0 0
        %1116 = vmatpush1.bf16.msra.mxu0 0
        %1117 = vmatprep.subr.bf16.mxu0 0
        %1118 = vmatpush1.bf16.msra.mxu0 0
        %1119 = vmatprep.subr.bf16.mxu0 0
        %1120 = vmatpush1.bf16.msra.mxu0 0
        %1121 = vmatprep.mubr.bf16.mxu0 0
        %1122 = vmatmul.mubr.bf16.gmra.mrb[0].mxu0 %v821
        %v1123 = vpop.f32.mrb[0].mxu0
        %v1124 = vadd.f32 %v1059, %v1123
        %v1125 = vpop.f32.mrb[0].mxu0
        %v1126 = vpop.f32.mrb[0].mxu0
        %v1127 = vadd.f32 %v1062, %v1126
        %v1128 = vpop.f32.mrb[0].mxu0
        %1129 = vmatprep.mubr.bf16.mxu0 0
        %1130 = vmatmul.mubr.bf16.gmra.mrb[0].mxu0 %v822
        %v1131 = vpop.f32.mrb[0].mxu0
        %v1132 = vadd.f32 %v1067, %v1131
        %v1133 = vpop.f32.mrb[0].mxu0
        %v1134 = vpop.f32.mrb[0].mxu0
        %v1135 = vadd.f32 %v1070, %v1134
        %v1136 = vpop.f32.mrb[0].mxu0
        %1137 = vmatprep.mubr.bf16.mxu0 0
        %1138 = vmatmul.mubr.bf16.gmra.mrb[0].mxu0 %v823
        %v1139 = vpop.f32.mrb[0].mxu0
        %v1140 = vadd.f32 %v1075, %v1139
        %v1141 = vpop.f32.mrb[0].mxu0
        %v1142 = vpop.f32.mrb[0].mxu0
        %v1143 = vadd.f32 %v1078, %v1142
        %v1144 = vpop.f32.mrb[0].mxu0
        %1145 = vmatprep.mubr.bf16.mxu0 0
        %1146 = vmatmul.mubr.bf16.gmra.mrb[0].mxu0 %v824
        %v1147 = vpop.f32.mrb[0].mxu0
        %v1148 = vadd.f32 %v1083, %v1147
        %v1149 = vpop.f32.mrb[0].mxu0
        %v1150 = vpop.f32.mrb[0].mxu0
        %v1151 = vadd.f32 %v1086, %v1150
        %v1152 = vpop.f32.mrb[0].mxu0
        %1153 = vdwg.mxu0
        %v1154 = vmax.f32 %v1124, 0.0
        %v1155 = vmax.f32 %v1127, 0.0
        %v1156 = vmax.f32 %v1132, 0.0
        %v1157 = vmax.f32 %v1135, 0.0
        %v1158 = vmax.f32 %v1140, 0.0
        %v1159 = vmax.f32 %v1143, 0.0
        %v1160 = vmax.f32 %v1148, 0.0
        %v1161 = vmax.f32 %v1151, 0.0
        %v1162 = vld [vmem:[%s5] sm:$0x1]
        %v1164 = vlaneseq
        %v1165 = vshrl.u32 %v1164, 7
        %v1166 = vsub.s32 0, %v1165
        %v1167 = vrot.slane %v1162, %v1166
        %v1169 = vmul.f32 %v1154, %v1167
        %v1170 = vmul.f32 %v1155, %v1167
        %v1171 = vmul.f32 %v1156, %v1167
        %v1172 = vmul.f32 %v1157, %v1167
        %v1173 = vmul.f32 %v1158, %v1167
        %v1174 = vmul.f32 %v1159, %v1167
        %v1175 = vmul.f32 %v1160, %v1167
        %v1176 = vmul.f32 %v1161, %v1167
        %v1177 = vld [vmem:[%s6] sm:$0x1]
        %v1179 = vlaneseq
        %v1180 = vshrl.u32 %v1179, 7
        %v1181 = vsub.s32 0, %v1180
        %v1182 = vrot.slane %v1177, %v1181
        %v1184 = vadd.f32 %v1169, %v1182
        %v1185 = vadd.f32 %v1170, %v1182
        %v1186 = vadd.f32 %v1171, %v1182
        %v1187 = vadd.f32 %v1172, %v1182
        %v1188 = vadd.f32 %v1173, %v1182
        %v1189 = vadd.f32 %v1174, %v1182
        %v1190 = vadd.f32 %v1175, %v1182
        %v1191 = vadd.f32 %v1176, %v1182
        %1192 = vst [vmem:[%s325] sm:$0xff] %v1184
        %1193 = vst [vmem:[%s325 + $0x8] sm:$0xff] %v1185
        %1194 = vst [vmem:[%s325 + $0x10] sm:$0xff] %v1186
        %1195 = vst [vmem:[%s325 + $0x18] sm:$0xff] %v1187
        %1196 = vst [vmem:[%s325 + $0x20] sm:$0xff] %v1188
        %1197 = vst [vmem:[%s325 + $0x28] sm:$0xff] %v1189
        %1198 = vst [vmem:[%s325 + $0x30] sm:$0xff] %v1190
        %1199 = vst [vmem:[%s325 + $0x38] sm:$0xff] %v1191
        %s1200 = sand.u32 %s185, 1
        %s1201 = scalar_lea.sflag [#allocation5], %s1200
        %s1202 = sand.u32 %s185, 1
        %s1203 = smul.addr %s1202, 64
        %s1204 = scalar_lea.vmem [#allocation9], %s1203
        // Predicated region
        $region61: #{tpu_custom_call.1} parent=47 // pred_check
          %p1205 = pneg %p195
        $region62: #{tpu_custom_call.1} parent=47 // pred_check_branch
          %1207 = sbr.rel (%p1205) target = $region64
        $region63: #{tpu_custom_call.1} parent=47 // pred_region
          %s1209 = ssub.s32 1024, 1024
          %1210 = vsyncadd %s1201, %s1209
          %s1211 = smul.addr %s25, 8
          %s1212 = smul.addr %s1211, 128
          %s1213 = scalar_lea.hbm %s7, %s1212
          %s1214 = sshll.u32 %s1204, 4
          %s1215 = int_to_ptr.vmem [resolvable:$true] %s1214
          %1220 = dma.vmem_to_hbm [thread:$0]  %s1215, 1024, %s1213, %s1201, 128, 128, 8
        $region64: #{tpu_custom_call.1} parent=47 // pred_fallthru
          _
      $region48: #{tpu_custom_call.1} parent=5 // pred_fallthru
        _
      %p1221 = scmp.le.s32.totalorder 2, %s20
      // Predicated region
      $region65: #{tpu_custom_call.1} parent=5 // pred_check
        %p1222 = pneg %p1221
      $region66: #{tpu_custom_call.1} parent=5 // pred_check_branch
        %1224 = sbr.rel (%p1222) target = $region68
      $region67: #{tpu_custom_call.1} parent=5 // pred_region
        %s1225 = ssub.s32 %s20, 2
        // Predicated region
        $region69: #{tpu_custom_call.1} parent=67 // pred_check
          %p1226 = pneg %p201
        $region70: #{tpu_custom_call.1} parent=67 // pred_check_branch
          %1228 = sbr.rel (%p1226) target = $region72
        $region71: #{tpu_custom_call.1} parent=67 // pred_region
          %s1229 = sand.u32 %s186, 1
          %s1230 = scalar_lea.sflag [#allocation5], %s1229
          %s1231 = sand.u32 %s186, 1
          %s1232 = smul.addr %s1231, 64
          %s1233 = scalar_lea.vmem [#allocation9], %s1232
          %1234 = dma.done %s1230, 1024
        $region72: #{tpu_custom_call.1} parent=67 // pred_fallthru
          _
      $region68: #{tpu_custom_call.1} parent=5 // pred_fallthru
        _
    $region6: #{tpu_custom_call.1} parent=1 // loop_footer
      %s24 = sadd.s32 1, %s20
    $region7: #{tpu_custom_call.1} parent=1 // loop_footer_branch
      %19 = sbr.rel target = $region3
    $region8: #{tpu_custom_call.1} parent=1 // loop_exit
      _
    %1235 = vsyncpa [#allocation4], 1
    %s1236 = scalar_lea.sflag [#allocation4], 1
    %1237 = vsyncpa %s1236, 1
    %1238 = vsyncpa [#allocation7], 1
    %1239 = vsyncpa [#allocation5], 1
    %s1240 = scalar_lea.sflag [#allocation5], 1
    %1241 = vsyncpa %s1240, 1

</llo_original>
